<compile_context>
chip_gen: v5e
topology: v5e:2x2
jax: 0.10.0
libtpu: 0.0.40
codegen_flags: <defaults>
</compile_context>

<pallas_src>
import jax
import jax.numpy as jnp
from jax.experimental import pallas as pl
from jax.experimental.pallas import tpu as pltpu

NEG_SLOPE = 0.01      # F.leaky_relu default
LANE = 128            # TPU lane width
TILE_B_MAX = 2048     # multiple of 256 -> fills v6e/v7x 256-wide MXU M tiles
                      # (multiple of 128 is enough on v5e's 4x128x128 MXU)


def _round_up(n, m):
    return (n + m - 1) // m * m


def _leaky_relu(x):
    return jnp.where(x > 0, x, NEG_SLOPE * x)


def dqn_kernel(x_ref, w1_ref, b1_ref, w2_ref, b2_ref, w3_ref, b3_ref, out_ref):
    cdt = w1_ref.dtype                      # MXU input dtype (bf16)
    x = x_ref[...].astype(cdt)              # f32 HBM -> bf16 in-register
    # layer 1: h1 = leaky_relu(x @ W1 + b1)   (f32 accumulate, f32 elementwise)
    h1 = jnp.dot(x, w1_ref[...], preferred_element_type=jnp.float32)
    h1 = _leaky_relu(h1 + b1_ref[...])
    # layer 2: h2 = leaky_relu(h1 @ W2 + b2)
    h2 = jnp.dot(h1.astype(cdt), w2_ref[...], preferred_element_type=jnp.float32)
    h2 = _leaky_relu(h2 + b2_ref[...])
    # layer 3 (no activation): q = h2 @ W3 + b3
    q = jnp.dot(h2.astype(cdt), w3_ref[...], preferred_element_type=jnp.float32)
    q = q + b3_ref[...]
    # store only the real output columns (output array is exactly out_dim wide)
    out_ref[...] = q[:, : out_ref.shape[1]].astype(out_ref.dtype)


def _choose_tile_b(batch):
    """Batch tile: small batches get one aligned tile; large batches get
    tiles that are multiples of 256 with at least 2 grid steps (v7x has 2
    TensorCores that only split the 'parallel' axis if there are >=2 steps)."""
    b_al = _round_up(batch, 8)
    if b_al <= 256:
        return b_al
    return min(TILE_B_MAX, _round_up(pl.cdiv(b_al, 2), 256))


def dqn_forward(x, params, out_dim):
    """x: (B, in_dim) float32.  params: output of prepare_params().
    Returns (B, out_dim) float32 (no post-kernel slice needed)."""
    w1, b1, w2, b2, w3, b3 = params
    B, in_dim = x.shape
    assert w1.shape[0] == in_dim
    hid_pad = w1.shape[1]
    mid_pad = w2.shape[1]
    w3_cols = w3.shape[1]          # small padding (>= out_dim, multiple of 16)
    assert w3_cols >= out_dim
    cdt = w1.dtype

    tile_b = _choose_tile_b(B)
    grid = (pl.cdiv(B, tile_b),)   # ragged last tile: OOB rows masked on store

    w_elems = in_dim * hid_pad + hid_pad * mid_pad + mid_pad * w3_cols
    wsize = jnp.dtype(cdt).itemsize
    cost = pl.CostEstimate(
        flops=2 * B * w_elems,
        transcendentals=0,
        bytes_accessed=(B * in_dim * 4                    # x (f32 in HBM)
                        + w_elems * wsize                  # weights (bf16)
                        + (hid_pad + mid_pad + w3_cols) * 4  # biases (f32)
                        + B * out_dim * 4),                # output (f32, unpadded)
    )

    out = pl.pallas_call(
        dqn_kernel,
        out_shape=jax.ShapeDtypeStruct((B, out_dim), jnp.float32),
        grid=grid,
        in_specs=[
            pl.BlockSpec((tile_b, in_dim), lambda i: (i, 0)),    # x: streamed
            pl.BlockSpec((in_dim, hid_pad), lambda i: (0, 0)),   # weights/biases:
            pl.BlockSpec((1, hid_pad), lambda i: (0, 0)),        #   VMEM-resident
            pl.BlockSpec((hid_pad, mid_pad), lambda i: (0, 0)),
            pl.BlockSpec((1, mid_pad), lambda i: (0, 0)),
            pl.BlockSpec((mid_pad, w3_cols), lambda i: (0, 0)),
            pl.BlockSpec((1, w3_cols), lambda i: (0, 0)),
        ],
        out_specs=pl.BlockSpec((tile_b, out_dim), lambda i: (i, 0)),
        compiler_params=pltpu.CompilerParams(
            dimension_semantics=("parallel",)),
        cost_estimate=cost,
    )(x, w1, b1, w2, b2, w3, b3)

    return out


def init_dqn_params(key, state_row, state_col, hidden_size=200):
    """Raw f32 params (PyTorch nn.Linear-equivalent U(-1/sqrt(fan_in), ...)),
    weights stored (in_features, out_features)."""
    in_dim = state_row * state_col * 2
    mid_dim = 100  # hardcoded in the PyTorch module
    out_dim = state_row * state_col

    def linear(k, fan_in, fan_out):
        kw, kb = jax.random.split(k)
        bound = fan_in ** -0.5
        w = jax.random.uniform(kw, (fan_in, fan_out), jnp.float32, -bound, bound)
        b = jax.random.uniform(kb, (1, fan_out), jnp.float32, -bound, bound)
        return w, b

    k1, k2, k3 = jax.random.split(key, 3)
    w1, b1 = linear(k1, in_dim, hidden_size)
    w2, b2 = linear(k2, hidden_size, mid_dim)
    w3, b3 = linear(k3, mid_dim, out_dim)
    return (w1, b1, w2, b2, w3, b3)


def prepare_params(params, compute_dtype=jnp.bfloat16):
    """Zero-pad hidden/mid feature dims up to a multiple of 128 (lane-dense
    intermediates), the final output dim only up to a multiple of 16, and cast
    weights to `compute_dtype`.  Biases stay f32 (added to the f32
    accumulator).  The input dim stays unpadded (full-extent block)."""
    w1, b1, w2, b2, w3, b3 = params

    def pad_to(a, rows, cols):
        out = jnp.zeros((rows, cols), a.dtype)
        return out.at[: a.shape[0], : a.shape[1]].set(a)

    in_dim, hid = w1.shape
    mid = w2.shape[1]
    out_dim = w3.shape[1]
    hid_p = _round_up(hid, LANE)
    mid_p = _round_up(mid, LANE)
    out_p = _round_up(out_dim, 16)   # narrow pad: output stream stays small

    w1p = pad_to(w1, in_dim, hid_p).astype(compute_dtype)
    b1p = pad_to(b1, 1, hid_p)
    w2p = pad_to(w2, hid_p, mid_p).astype(compute_dtype)
    b2p = pad_to(b2, 1, mid_p)
    w3p = pad_to(w3, mid_p, out_p).astype(compute_dtype)
    b3p = pad_to(b3, 1, out_p)
    return (w1p, b1p, w2p, b2p, w3p, b3p)


def dqn_forward_ref_f32(x, raw_params):
    """Pure-f32 plain-JAX reference (PyTorch semantics)."""
    w1, b1, w2, b2, w3, b3 = raw_params
    h = jax.nn.leaky_relu(x @ w1 + b1, NEG_SLOPE)
    h = jax.nn.leaky_relu(h @ w2 + b2, NEG_SLOPE)
    return h @ w3 + b3


def dqn_forward_ref_matched(x, prepared_params, out_dim):
    """Plain-JAX replica of the kernel's padded / mixed-precision math."""
    w1, b1, w2, b2, w3, b3 = prepared_params
    cdt = w1.dtype
    h = jax.nn.leaky_relu(
        jnp.dot(x.astype(cdt), w1, preferred_element_type=jnp.float32) + b1, NEG_SLOPE)
    h = jax.nn.leaky_relu(
        jnp.dot(h.astype(cdt), w2, preferred_element_type=jnp.float32) + b2, NEG_SLOPE)
    q = jnp.dot(h.astype(cdt), w3, preferred_element_type=jnp.float32) + b3
    return q[:, :out_dim]


if __name__ == "__main__":
    # Tic-tac-toe board: 3x3, two-plane one-hot state encoding -> 18 inputs.
    state_row, state_col = 3, 3
    hidden_size = 32  # small hidden size for the synthetic test
    batch = 8         # NOTE: perf wins only materialize at B >= ~4096

    key = jax.random.PRNGKey(0)
    kp, kx = jax.random.split(key)
    raw_params = init_dqn_params(kp, state_row, state_col, hidden_size)
    params = prepare_params(raw_params, compute_dtype=jnp.bfloat16)
    x = jax.random.uniform(kx, (batch, state_row * state_col * 2), jnp.float32)

    out_dim = state_row * state_col
    out = jax.block_until_ready(dqn_forward(x, params, out_dim))
    assert out.shape == (batch, out_dim)

    # Tight check against a plain-JAX replica of the same padded bf16 math.
    ref_matched = dqn_forward_ref_matched(x, params, out_dim)
    assert jnp.allclose(out, ref_matched, atol=1e-4, rtol=1e-4), (
        float(jnp.max(jnp.abs(out - ref_matched))))

    # Sanity check against full-f32 PyTorch-semantics reference
    # (tolerance accounts for bf16 weight/activation quantization).
    ref_f32 = dqn_forward_ref_f32(x, raw_params)
    assert jnp.allclose(out, ref_f32, atol=5e-2, rtol=5e-2), (
        float(jnp.max(jnp.abs(out - ref_f32))))

    print("KERNEL_OK")
</pallas_src>

<mosaic_0001>
module attributes {stable_mosaic.version = 11 : i64} {
  func.func @dqn_kernel(%arg0: i32, %arg1: memref<8x18xf32, #tpu.memory_space<vmem>>, %arg2: memref<18x128xbf16, #tpu.memory_space<vmem>>, %arg3: memref<1x128xf32, #tpu.memory_space<vmem>>, %arg4: memref<128x128xbf16, #tpu.memory_space<vmem>>, %arg5: memref<1x128xf32, #tpu.memory_space<vmem>>, %arg6: memref<128x16xbf16, #tpu.memory_space<vmem>>, %arg7: memref<1x16xf32, #tpu.memory_space<vmem>>, %arg8: memref<8x9xf32, #tpu.memory_space<vmem>>) attributes {dimension_semantics = [#tpu.dimension_semantics<parallel>], iteration_bounds = array<i64: 1>, scalar_prefetch = 0 : i64, scratch_operands = 0 : i64, tpu.core_type = #tpu.core_type<tc>, window_params = [{transform_indices = @transform_0, window_bounds = array<i64: 8, 18>}, {pipeline_mode = #tpu.pipeline_mode<synchronous>, transform_indices = @transform_1, window_bounds = array<i64: 18, 128>}, {pipeline_mode = #tpu.pipeline_mode<synchronous>, transform_indices = @transform_2, window_bounds = array<i64: 1, 128>}, {pipeline_mode = #tpu.pipeline_mode<synchronous>, transform_indices = @transform_3, window_bounds = array<i64: 128, 128>}, {pipeline_mode = #tpu.pipeline_mode<synchronous>, transform_indices = @transform_4, window_bounds = array<i64: 1, 128>}, {pipeline_mode = #tpu.pipeline_mode<synchronous>, transform_indices = @transform_5, window_bounds = array<i64: 128, 16>}, {pipeline_mode = #tpu.pipeline_mode<synchronous>, transform_indices = @transform_6, window_bounds = array<i64: 1, 16>}, {transform_indices = @transform_7, window_bounds = array<i64: 8, 9>}]} {
    %c0 = arith.constant 0 : index
    %c0_0 = arith.constant 0 : index
    %0 = vector.load %arg1[%c0, %c0_0] : memref<8x18xf32, #tpu.memory_space<vmem>>, vector<8x18xf32>
    %1 = arith.truncf %0 : vector<8x18xf32> to vector<8x18xbf16>
    %c0_1 = arith.constant 0 : index
    %c0_2 = arith.constant 0 : index
    %2 = vector.load %arg2[%c0_1, %c0_2] : memref<18x128xbf16, #tpu.memory_space<vmem>>, vector<18x128xbf16>
    %cst = arith.constant dense<0.000000e+00> : vector<8x128xf32>
    %3 = tpu.matmul %1, %2, %cst {dimension_numbers = #tpu.dot_dimension_numbers<[1], [0], [0], [1], [0, 0, 1, 1], [], []>} : vector<8x18xbf16>, vector<18x128xbf16>, vector<8x128xf32> -> vector<8x128xf32>
    %c0_3 = arith.constant 0 : index
    %c0_4 = arith.constant 0 : index
    %4 = vector.load %arg3[%c0_3, %c0_4] : memref<1x128xf32, #tpu.memory_space<vmem>>, vector<1x128xf32>
    %5 = vector.broadcast %4 : vector<1x128xf32> to vector<8x128xf32>
    %6 = arith.addf %3, %5 : vector<8x128xf32>
    %cst_5 = arith.constant 0.000000e+00 : f32
    %7 = vector.broadcast %cst_5 : f32 to vector<8x128xf32>
    %8 = arith.cmpf ogt, %6, %7 : vector<8x128xf32>
    %cst_6 = arith.constant 0.00999999977 : f32
    %9 = vector.broadcast %cst_6 : f32 to vector<8x128xf32>
    %10 = arith.mulf %9, %6 : vector<8x128xf32>
    %11 = arith.select %8, %6, %10 : vector<8x128xi1>, vector<8x128xf32>
    %12 = arith.truncf %11 : vector<8x128xf32> to vector<8x128xbf16>
    %c0_7 = arith.constant 0 : index
    %c0_8 = arith.constant 0 : index
    %13 = vector.load %arg4[%c0_7, %c0_8] : memref<128x128xbf16, #tpu.memory_space<vmem>>, vector<128x128xbf16>
    %cst_9 = arith.constant dense<0.000000e+00> : vector<8x128xf32>
    %14 = tpu.matmul %12, %13, %cst_9 {dimension_numbers = #tpu.dot_dimension_numbers<[1], [0], [0], [1], [0, 0, 1, 1], [], []>} : vector<8x128xbf16>, vector<128x128xbf16>, vector<8x128xf32> -> vector<8x128xf32>
    %c0_10 = arith.constant 0 : index
    %c0_11 = arith.constant 0 : index
    %15 = vector.load %arg5[%c0_10, %c0_11] : memref<1x128xf32, #tpu.memory_space<vmem>>, vector<1x128xf32>
    %16 = vector.broadcast %15 : vector<1x128xf32> to vector<8x128xf32>
    %17 = arith.addf %14, %16 : vector<8x128xf32>
    %cst_12 = arith.constant 0.000000e+00 : f32
    %18 = vector.broadcast %cst_12 : f32 to vector<8x128xf32>
    %19 = arith.cmpf ogt, %17, %18 : vector<8x128xf32>
    %cst_13 = arith.constant 0.00999999977 : f32
    %20 = vector.broadcast %cst_13 : f32 to vector<8x128xf32>
    %21 = arith.mulf %20, %17 : vector<8x128xf32>
    %22 = arith.select %19, %17, %21 : vector<8x128xi1>, vector<8x128xf32>
    %23 = arith.truncf %22 : vector<8x128xf32> to vector<8x128xbf16>
    %c0_14 = arith.constant 0 : index
    %c0_15 = arith.constant 0 : index
    %24 = vector.load %arg6[%c0_14, %c0_15] : memref<128x16xbf16, #tpu.memory_space<vmem>>, vector<128x16xbf16>
    %cst_16 = arith.constant dense<0.000000e+00> : vector<8x16xf32>
    %25 = tpu.matmul %23, %24, %cst_16 {dimension_numbers = #tpu.dot_dimension_numbers<[1], [0], [0], [1], [0, 0, 1, 1], [], []>} : vector<8x128xbf16>, vector<128x16xbf16>, vector<8x16xf32> -> vector<8x16xf32>
    %c0_17 = arith.constant 0 : index
    %c0_18 = arith.constant 0 : index
    %26 = vector.load %arg7[%c0_17, %c0_18] : memref<1x16xf32, #tpu.memory_space<vmem>>, vector<1x16xf32>
    %27 = vector.broadcast %26 : vector<1x16xf32> to vector<8x16xf32>
    %28 = arith.addf %25, %27 : vector<8x16xf32>
    %29 = vector.extract_strided_slice %28 {offsets = [0, 0], sizes = [8, 9], strides = [1, 1]} : vector<8x16xf32> to vector<8x9xf32>
    %c0_19 = arith.constant 0 : index
    %c0_20 = arith.constant 0 : index
    %30 = vector.load %arg8[%c0_19, %c0_20] : memref<8x9xf32, #tpu.memory_space<vmem>>, vector<8x9xf32>
    tpu.vector_store %arg8[%c0_19, %c0_20], %29 {strides = array<i32>} : memref<8x9xf32, #tpu.memory_space<vmem>>, vector<8x9xf32>,
    return
  }
  func.func @transform_0(%arg0: i32) -> (i32, i32) {
    %c0_i32 = arith.constant 0 : i32
    %c0_i32_0 = arith.constant 0 : i32
    return %arg0, %c0_i32 : i32, i32
  }
  func.func @transform_1(%arg0: i32) -> (i32, i32) {
    %c0_i32 = arith.constant 0 : i32
    %c0_i32_0 = arith.constant 0 : i32
    %c0_i32_1 = arith.constant 0 : i32
    return %c0_i32, %c0_i32_0 : i32, i32
  }
  func.func @transform_2(%arg0: i32) -> (i32, i32) {
    %c0_i32 = arith.constant 0 : i32
    %c0_i32_0 = arith.constant 0 : i32
    %c0_i32_1 = arith.constant 0 : i32
    return %c0_i32, %c0_i32_0 : i32, i32
  }
  func.func @transform_3(%arg0: i32) -> (i32, i32) {
    %c0_i32 = arith.constant 0 : i32
    %c0_i32_0 = arith.constant 0 : i32
    %c0_i32_1 = arith.constant 0 : i32
    return %c0_i32, %c0_i32_0 : i32, i32
  }
  func.func @transform_4(%arg0: i32) -> (i32, i32) {
    %c0_i32 = arith.constant 0 : i32
    %c0_i32_0 = arith.constant 0 : i32
    %c0_i32_1 = arith.constant 0 : i32
    return %c0_i32, %c0_i32_0 : i32, i32
  }
  func.func @transform_5(%arg0: i32) -> (i32, i32) {
    %c0_i32 = arith.constant 0 : i32
    %c0_i32_0 = arith.constant 0 : i32
    %c0_i32_1 = arith.constant 0 : i32
    return %c0_i32, %c0_i32_0 : i32, i32
  }
  func.func @transform_6(%arg0: i32) -> (i32, i32) {
    %c0_i32 = arith.constant 0 : i32
    %c0_i32_0 = arith.constant 0 : i32
    %c0_i32_1 = arith.constant 0 : i32
    return %c0_i32, %c0_i32_0 : i32, i32
  }
  func.func @transform_7(%arg0: i32) -> (i32, i32) {
    %c0_i32 = arith.constant 0 : i32
    %c0_i32_0 = arith.constant 0 : i32
    return %arg0, %c0_i32 : i32, i32
  }
}

</mosaic_0001>

<llo_original>
// kernel: tpu_custom_call.1
$region0: #{tpu_custom_call.1}
  #allocation0 [shape = 'u32[]', space=smem, size = 0x4, offset = 0x4, fixed_abs, tag = 'smem constant byte address 0x4 - core index']
  #allocation1 [shape = 'u32[72,128]{1,0:T(1,128)}', space=vmem, size = 0x9000, scoped, tag = 'internal scratch']
  %s0 = inlined_call_operand.vmem [shape: f32[8,18], index: 0, kind: input, shape index: {}]
  %s1 = inlined_call_operand.hbm [shape: bf16[18,128], index: 1, kind: input, shape index: {}]
  %s2 = inlined_call_operand.vmem [shape: f32[1,128], index: 2, kind: input, shape index: {}]
  %s3 = inlined_call_operand.vmem [shape: bf16[128,128], index: 3, kind: input, shape index: {}]
  %s4 = inlined_call_operand.vmem [shape: f32[1,128], index: 4, kind: input, shape index: {}]
  %s5 = inlined_call_operand.vmem [shape: bf16[128,16], index: 5, kind: input, shape index: {}]
  %s6 = inlined_call_operand.vmem [shape: f32[1,16], index: 6, kind: input, shape index: {}]
  %s7 = inlined_call_operand.hbm [shape: f32[8,9], index: 7, kind: output, shape index: {}]
  %s8 = sld [smem:[#allocation0]]
  $region42: #{tpu_custom_call.1} parent=0
    _
  %s10 = ssub.s32 1, %s8
  %s11 = scalar_select 0, %s10, %s8
  $region1: #{tpu_custom_call.1} parent=0
    #allocation2 [shape = 'u8[6144]{0}', space=vmem, size = 0x1800, scoped, tag = 'input window, operand 1, single buffered']
    #allocation3 [shape = 's32[1]{0}', space=sflag, size = 0x4, scoped, tag = 'scoped memory for tpu_custom_call.1']
    #allocation4 [shape = 's32[1]{0}', space=sflag, size = 0x4, scoped, tag = 'scoped memory for tpu_custom_call.1']
    #allocation5 [shape = 'u8[4096]{0}', space=vmem, size = 0x1000, scoped, tag = 'output window, operand 0, single buffered']
    %12 = vsyncpa [#allocation3], 0
    %13 = vsyncpa [#allocation4], 0
    // Predicated region
    $region2: #{tpu_custom_call.1} parent=1 // pred_check
      _
    $region3: #{tpu_custom_call.1} parent=1 // pred_check_branch
      %15 = sbr.rel (0) target = $region5
    $region4: #{tpu_custom_call.1} parent=1 // pred_region
      _
    $region5: #{tpu_custom_call.1} parent=1 // pred_fallthru
      _
    // Predicated region
    $region6: #{tpu_custom_call.1} parent=1 // pred_check
      _
    $region7: #{tpu_custom_call.1} parent=1 // pred_check_branch
      %17 = sbr.rel (0) target = $region9
    $region8: #{tpu_custom_call.1} parent=1 // pred_region
      %19 = vsyncadd [#allocation3], 0
      %s20 = sshll.u32 %s1, 4
      %s21 = int_to_ptr.hbm [resolvable:$true] %s20
      %s22 = sshll.u32 [#allocation2], 4
      %s23 = int_to_ptr.vmem [resolvable:$true] %s22
      %28 = dma.hbm_to_vmem [thread:$0]  %s21, 192, %s23, [#allocation3], 64, 64, 4
    $region9: #{tpu_custom_call.1} parent=1 // pred_fallthru
      _
    // Predicated region
    $region10: #{tpu_custom_call.1} parent=1 // pred_check
      _
    $region11: #{tpu_custom_call.1} parent=1 // pred_check_branch
      %30 = sbr.rel (0) target = $region13
    $region12: #{tpu_custom_call.1} parent=1 // pred_region
      _
    $region13: #{tpu_custom_call.1} parent=1 // pred_fallthru
      _
    // Predicated region
    $region14: #{tpu_custom_call.1} parent=1 // pred_check
      _
    $region15: #{tpu_custom_call.1} parent=1 // pred_check_branch
      %32 = sbr.rel (0) target = $region17
    $region16: #{tpu_custom_call.1} parent=1 // pred_region
      _
    $region17: #{tpu_custom_call.1} parent=1 // pred_fallthru
      _
    // Predicated region
    $region18: #{tpu_custom_call.1} parent=1 // pred_check
      _
    $region19: #{tpu_custom_call.1} parent=1 // pred_check_branch
      %34 = sbr.rel (0) target = $region21
    $region20: #{tpu_custom_call.1} parent=1 // pred_region
      _
    $region21: #{tpu_custom_call.1} parent=1 // pred_fallthru
      _
    // Predicated region
    $region22: #{tpu_custom_call.1} parent=1 // pred_check
      _
    $region23: #{tpu_custom_call.1} parent=1 // pred_check_branch
      %36 = sbr.rel (0) target = $region25
    $region24: #{tpu_custom_call.1} parent=1 // pred_region
      _
    $region25: #{tpu_custom_call.1} parent=1 // pred_fallthru
      _
    // Predicated region
    $region26: #{tpu_custom_call.1} parent=1 // pred_check
      _
    $region27: #{tpu_custom_call.1} parent=1 // pred_check_branch
      %38 = sbr.rel (0) target = $region29
    $region28: #{tpu_custom_call.1} parent=1 // pred_region
      _
    $region29: #{tpu_custom_call.1} parent=1 // pred_fallthru
      _
    // Predicated region
    $region30: #{tpu_custom_call.1} parent=1 // pred_check
      _
    $region31: #{tpu_custom_call.1} parent=1 // pred_check_branch
      %40 = sbr.rel (0) target = $region33
    $region32: #{tpu_custom_call.1} parent=1 // pred_region
      %42 = dma.done [#allocation3], 192
    $region33: #{tpu_custom_call.1} parent=1 // pred_fallthru
      _
    %v44 = vld [vmem:[%s0] sm:$0xff]
    %v45 = vpack.c.bf16 %v44, %v44
    %v46 = vld [vmem:[#allocation2] sm:$0xf]
    %v47 = vld [vmem:[#allocation2 + $0x4] sm:$0xf]
    %v48 = vld [vmem:[#allocation2 + $0x8] sm:$0x1]
    %v49 = vld [vmem:[%s2] sm:$0x1]
    %v51 = vperm.slane %v49, 0
    %v56 = vunpack.c.l.b16 %v46
    %v57 = vunpack.c.l.b16 %v47
    %v58 = vunpack.c.l.b16 %v48
    %v59 = vpack.c.b16 %v57, %v56
    %v60 = vpack.c.b16 %v58, %v58
    %vm62 = vcmask 146432
    %v64 = vsel %vm62, %v45, 0
    %vm66 = vcmask 1040384
    %v68 = vsel %vm66, %v60, 0
    %70 = vmatpush.bf16.msra.mxu0 0
    %71 = vmatpush.bf16.msra.mxu0 0
    %72 = vmatpush.bf16.msra.mxu0 0
    %73 = vmatpush.bf16.msra.mxu0 0
    %74 = vmatpush.bf16.msra.mxu0 0
    %75 = vmatpush.bf16.msra.mxu0 0
    %76 = vmatpush.bf16.msra.mxu0 %v68
    %77 = vmatpush.bf16.msra.mxu0 %v59
    %78 = vmatmul.bf16.gmra.mxu0 %v64
    %v79 = vpop.f32.mrf.mxu0
    %v80 = vadd.f32 %v51, %v79
    %v81 = vpop.f32.mrf.mxu0
    %82 = vdwg.mxu0
    %vm83 = vcmp.gt.f32.partialorder %v80, 0.0
    %v84 = vmul.f32 %v80, 0.01
    %v85 = vsel %vm83, %v80, %v84
    %v86 = vpack.c.bf16 %v85, %v85
    %v87 = vld [vmem:[%s3] sm:$0xf]
    %v88 = vld [vmem:[%s3 + $0x4] sm:$0xf]
    %v89 = vld [vmem:[%s3 + $0x8] sm:$0xf]
    %v90 = vld [vmem:[%s3 + $0xc] sm:$0xf]
    %v91 = vld [vmem:[%s3 + $0x10] sm:$0xf]
    %v92 = vld [vmem:[%s3 + $0x14] sm:$0xf]
    %v93 = vld [vmem:[%s3 + $0x18] sm:$0xf]
    %v94 = vld [vmem:[%s3 + $0x1c] sm:$0xf]
    %v95 = vld [vmem:[%s3 + $0x20] sm:$0xf]
    %v96 = vld [vmem:[%s3 + $0x24] sm:$0xf]
    %v97 = vld [vmem:[%s3 + $0x28] sm:$0xf]
    %v98 = vld [vmem:[%s3 + $0x2c] sm:$0xf]
    %v99 = vld [vmem:[%s3 + $0x30] sm:$0xf]
    %v100 = vld [vmem:[%s3 + $0x34] sm:$0xf]
    %v101 = vld [vmem:[%s3 + $0x38] sm:$0xf]
    %v102 = vld [vmem:[%s3 + $0x3c] sm:$0xf]
    %v103 = vld [vmem:[%s4] sm:$0x1]
    %v105 = vperm.slane %v103, 0
    %v123 = vunpack.c.l.b16 %v87
    %v124 = vunpack.c.l.b16 %v88
    %v125 = vunpack.c.l.b16 %v89
    %v126 = vunpack.c.l.b16 %v90
    %v127 = vunpack.c.l.b16 %v91
    %v128 = vunpack.c.l.b16 %v92
    %v129 = vunpack.c.l.b16 %v93
    %v130 = vunpack.c.l.b16 %v94
    %v131 = vunpack.c.l.b16 %v95
    %v132 = vunpack.c.l.b16 %v96
    %v133 = vunpack.c.l.b16 %v97
    %v134 = vunpack.c.l.b16 %v98
    %v135 = vunpack.c.l.b16 %v99
    %v136 = vunpack.c.l.b16 %v100
    %v137 = vunpack.c.l.b16 %v101
    %v138 = vunpack.c.l.b16 %v102
    %v139 = vpack.c.b16 %v124, %v123
    %v140 = vpack.c.b16 %v126, %v125
    %v141 = vpack.c.b16 %v128, %v127
    %v142 = vpack.c.b16 %v130, %v129
    %v143 = vpack.c.b16 %v132, %v131
    %v144 = vpack.c.b16 %v134, %v133
    %v145 = vpack.c.b16 %v136, %v135
    %v146 = vpack.c.b16 %v138, %v137
    %155 = vmatpush.bf16.msra.mxu0 %v146
    %156 = vmatpush.bf16.msra.mxu0 %v145
    %157 = vmatpush.bf16.msra.mxu0 %v144
    %158 = vmatpush.bf16.msra.mxu0 %v143
    %159 = vmatpush.bf16.msra.mxu0 %v142
    %160 = vmatpush.bf16.msra.mxu0 %v141
    %161 = vmatpush.bf16.msra.mxu0 %v140
    %162 = vmatpush.bf16.msra.mxu0 %v139
    %163 = vmatmul.bf16.gmra.mxu0 %v86
    %v164 = vpop.f32.mrf.mxu0
    %v165 = vadd.f32 %v105, %v164
    %v166 = vpop.f32.mrf.mxu0
    %167 = vdwg.mxu0
    %vm168 = vcmp.gt.f32.partialorder %v165, 0.0
    %v169 = vmul.f32 %v165, 0.01
    %v170 = vsel %vm168, %v165, %v169
    %v171 = vpack.c.bf16 %v170, %v170
    %v172 = vld [vmem:[%s5] sm:$0xf]
    %v173 = vld [vmem:[%s5 + $0x4] sm:$0xf]
    %v174 = vld [vmem:[%s5 + $0x8] sm:$0xf]
    %v175 = vld [vmem:[%s5 + $0xc] sm:$0xf]
    %v176 = vld [vmem:[%s5 + $0x10] sm:$0xf]
    %v177 = vld [vmem:[%s5 + $0x14] sm:$0xf]
    %v178 = vld [vmem:[%s5 + $0x18] sm:$0xf]
    %v179 = vld [vmem:[%s5 + $0x1c] sm:$0xf]
    %v180 = vld [vmem:[%s5 + $0x20] sm:$0xf]
    %v181 = vld [vmem:[%s5 + $0x24] sm:$0xf]
    %v182 = vld [vmem:[%s5 + $0x28] sm:$0xf]
    %v183 = vld [vmem:[%s5 + $0x2c] sm:$0xf]
    %v184 = vld [vmem:[%s5 + $0x30] sm:$0xf]
    %v185 = vld [vmem:[%s5 + $0x34] sm:$0xf]
    %v186 = vld [vmem:[%s5 + $0x38] sm:$0xf]
    %v187 = vld [vmem:[%s5 + $0x3c] sm:$0xf]
    %v188 = vld [vmem:[%s6] sm:$0x1]
    %v190 = vperm.slane %v188, 0
    %v208 = vunpack.c.l.b16 %v172
    %v209 = vunpack.c.l.b16 %v173
    %v210 = vunpack.c.l.b16 %v174
    %v211 = vunpack.c.l.b16 %v175
    %v212 = vunpack.c.l.b16 %v176
    %v213 = vunpack.c.l.b16 %v177
    %v214 = vunpack.c.l.b16 %v178
    %v215 = vunpack.c.l.b16 %v179
    %v216 = vunpack.c.l.b16 %v180
    %v217 = vunpack.c.l.b16 %v181
    %v218 = vunpack.c.l.b16 %v182
    %v219 = vunpack.c.l.b16 %v183
    %v220 = vunpack.c.l.b16 %v184
    %v221 = vunpack.c.l.b16 %v185
    %v222 = vunpack.c.l.b16 %v186
    %v223 = vunpack.c.l.b16 %v187
    %v224 = vpack.c.b16 %v209, %v208
    %v225 = vpack.c.b16 %v211, %v210
    %v226 = vpack.c.b16 %v213, %v212
    %v227 = vpack.c.b16 %v215, %v214
    %v228 = vpack.c.b16 %v217, %v216
    %v229 = vpack.c.b16 %v219, %v218
    %v230 = vpack.c.b16 %v221, %v220
    %v231 = vpack.c.b16 %v223, %v222
    %240 = vmatpush.bf16.msra.mxu0 %v231
    %241 = vmatpush.bf16.msra.mxu0 %v230
    %242 = vmatpush.bf16.msra.mxu0 %v229
    %243 = vmatpush.bf16.msra.mxu0 %v228
    %244 = vmatpush.bf16.msra.mxu0 %v227
    %245 = vmatpush.bf16.msra.mxu0 %v226
    %246 = vmatpush.bf16.msra.mxu0 %v225
    %247 = vmatpush.bf16.msra.mxu0 %v224
    %248 = vmatmul.bf16.gmra.mxu0 %v171
    %v249 = vpop.f32.mrf.mxu0
    %v250 = vadd.f32 %v190, %v249
    %v251 = vpop.f32.mrf.mxu0
    %252 = vdwg.mxu0
    %vm253 = vcmask 72704
    %254 = vst.msk [vmem:[#allocation5] sm:$0xff] %vm253, %v250
    // Predicated region
    $region34: #{tpu_custom_call.1} parent=1 // pred_check
      _
    $region35: #{tpu_custom_call.1} parent=1 // pred_check_branch
      %256 = sbr.rel (0) target = $region37
    $region36: #{tpu_custom_call.1} parent=1 // pred_region
      %258 = vsyncadd [#allocation4], 0
      %s260 = sshll.u32 [#allocation5], 4
      %s261 = int_to_ptr.vmem [resolvable:$true] %s260
      %s262 = sshll.u32 %s7, 4
      %s263 = int_to_ptr.hbm [resolvable:$true] %s262
      %265 = dma.vmem_to_hbm [thread:$0]  %s261, 128, %s263, [#allocation4]
    $region37: #{tpu_custom_call.1} parent=1 // pred_fallthru
      _
    // Predicated region
    $region38: #{tpu_custom_call.1} parent=1 // pred_check
      _
    $region39: #{tpu_custom_call.1} parent=1 // pred_check_branch
      %267 = sbr.rel (0) target = $region41
    $region40: #{tpu_custom_call.1} parent=1 // pred_region
      %269 = dma.done [#allocation4], 128
    $region41: #{tpu_custom_call.1} parent=1 // pred_fallthru
      _
    %270 = vsyncpa [#allocation3], 1
    %271 = vsyncpa [#allocation4], 1

</llo_original>
